<compile_context>
chip_gen: v7x
topology: tpu7x:2x2x1
jax: 0.10.0
libtpu: 0.0.40
codegen_flags: <defaults>
</compile_context>

<pallas_src>
import functools

import jax
import jax.numpy as jnp
from jax.experimental import pallas as pl
from jax.experimental.pallas import tpu as pltpu

LANES = 128
MAX_TILE_ROWS = 1024  # 1024x128 f32 = 512 KiB / input / buffer -> well under scoped VMEM


def _bce_blur_kernel(pred_ref, true_ref, out_ref, *, alpha, n, tile_rows):
    """One tile: stable BCE-with-logits * blur factor -> (8, 128) partial sum."""
    i = pl.program_id(0)

    x = pred_ref[...].astype(jnp.float32)
    y = true_ref[...].astype(jnp.float32)

    # In-kernel padding mask (n is a trace-time constant; no mask array in HBM).
    row_ids = jax.lax.broadcasted_iota(jnp.int32, (tile_rows, LANES), 0)
    lane_ids = jax.lax.broadcasted_iota(jnp.int32, (tile_rows, LANES), 1)
    idx = (i * tile_rows + row_ids) * LANES + lane_ids
    valid = idx < n

    # Numerically-stable BCEWithLogitsLoss(reduction='none'), sharing e = exp(-|x|):
    #   bce     = max(x, 0) - x*y + log1p(e)
    #   sigmoid = x >= 0 ?  1/(1+e)  :  e/(1+e)
    e = jnp.exp(-jnp.abs(x))                                   # EUP exp
    bce = jnp.maximum(x, 0.0) - x * y + jnp.log1p(e)           # EUP log
    r = 1.0 / (1.0 + e)                                        # EUP reciprocal
    p = jnp.where(x >= 0.0, r, e * r)                          # sigmoid(x)

    dx = p - y
    alpha_factor = 1.0 - jnp.exp((dx - 1.0) / (alpha + 1e-4))  # EUP exp

    loss = jnp.where(valid, bce * alpha_factor, 0.0)

    # Lane/sublane-shaped partial sum: collapse groups of 8 sublanes with pure
    # VPU vreg adds (no cross-lane XLU reduce in the hot loop, no serial
    # scalar accumulator carried across grid steps).
    out_ref[...] = jnp.sum(loss.reshape(tile_rows // 8, 8, LANES), axis=0)


def bce_blur_with_logits_loss(pred, true, alpha=0.05):
    """mean( BCEWithLogits(pred,true) * (1 - exp((sigmoid(pred)-true-1)/(alpha+1e-4))) )."""
    assert pred.shape == true.shape
    n = pred.size

    rows = pl.cdiv(n, LANES)
    # Biggest tile up to MAX_TILE_ROWS, kept a multiple of 16 sublanes so the
    # same code also handles bf16/f16 inputs' sublane packing.
    tile_rows = min(MAX_TILE_ROWS, ((rows + 15) // 16) * 16)
    rows_padded = pl.cdiv(rows, tile_rows) * tile_rows
    n_padded = rows_padded * LANES
    num_tiles = rows_padded // tile_rows

    # Small tail pad only; dtype cast happens inside the kernel.
    pred2d = jnp.pad(pred.reshape(-1), (0, n_padded - n)).reshape(rows_padded, LANES)
    true2d = jnp.pad(true.reshape(-1), (0, n_padded - n)).reshape(rows_padded, LANES)

    tile_spec = pl.BlockSpec((tile_rows, LANES), lambda i: (i, 0))

    partials = pl.pallas_call(
        functools.partial(_bce_blur_kernel, alpha=alpha, n=n, tile_rows=tile_rows),
        out_shape=jax.ShapeDtypeStruct((num_tiles, 8, LANES), jnp.float32),
        grid_spec=pltpu.PrefetchScalarGridSpec(
            num_scalar_prefetch=0,
            grid=(num_tiles,),
            in_specs=[tile_spec, tile_spec],
            out_specs=pl.BlockSpec((None, 8, LANES), lambda i: (i, 0, 0)),
        ),
        compiler_params=pltpu.CompilerParams(
            dimension_semantics=("parallel",)),  # independent tiles -> v7x megacore friendly
    )(pred2d, true2d)

    # Tiny final reduction (num_tiles * 8 * 128 floats) done by XLA.
    return jnp.sum(partials) / jnp.float32(n)


def _reference(pred, true, alpha=0.05):
    x = pred.astype(jnp.float32)
    y = true.astype(jnp.float32)
    bce = jnp.maximum(x, 0.0) - x * y + jnp.log1p(jnp.exp(-jnp.abs(x)))
    p = jax.nn.sigmoid(x)
    dx = p - y
    af = 1.0 - jnp.exp((dx - 1.0) / (alpha + 1e-4))
    return jnp.mean(bce * af)


if __name__ == "__main__":
    key = jax.random.PRNGKey(0)
    k1, k2 = jax.random.split(key)
    # Small NCHW-shaped logits / targets, consistent with a detection head.
    pred = jax.random.normal(k1, (2, 4, 16, 16), dtype=jnp.float32)
    true = (jax.random.uniform(k2, (2, 4, 16, 16)) > 0.5).astype(jnp.float32)

    out = bce_blur_with_logits_loss(pred, true, alpha=0.05)
    out = jax.block_until_ready(out)

    ref = _reference(pred, true, alpha=0.05)
    assert jnp.allclose(out, ref, rtol=1e-5, atol=1e-6), (out, ref)
    print("KERNEL_OK")
</pallas_src>

<mosaic_0001>
module attributes {stable_mosaic.version = 11 : i64} {
  func.func @_bce_blur_kernel(%arg0: i32, %arg1: memref<16x128xf32, #tpu.memory_space<vmem>>, %arg2: memref<16x128xf32, #tpu.memory_space<vmem>>, %arg3: memref<1x8x128xf32, #tpu.memory_space<vmem>>) attributes {dimension_semantics = [#tpu.dimension_semantics<parallel>], iteration_bounds = array<i64: 1>, scalar_prefetch = 0 : i64, scratch_operands = 0 : i64, tpu.core_type = #tpu.core_type<tc>, window_params = [{transform_indices = @transform_0, window_bounds = array<i64: 16, 128>}, {transform_indices = @transform_1, window_bounds = array<i64: 16, 128>}, {transform_indices = @transform_2, window_bounds = array<i64: 1, 8, 128>}]} {
    %c0 = arith.constant 0 : index
    %c0_0 = arith.constant 0 : index
    %0 = vector.load %arg1[%c0, %c0_0] : memref<16x128xf32, #tpu.memory_space<vmem>>, vector<16x128xf32>
    %c0_1 = arith.constant 0 : index
    %c0_2 = arith.constant 0 : index
    %1 = vector.load %arg2[%c0_1, %c0_2] : memref<16x128xf32, #tpu.memory_space<vmem>>, vector<16x128xf32>
    %2 = tpu.iota {dimensions = array<i32: 0>} : vector<16x128xi32>
    %3 = tpu.iota {dimensions = array<i32: 1>} : vector<16x128xi32>
    %c16_i32 = arith.constant 16 : i32
    %4 = arith.muli %arg0, %c16_i32 : i32
    %5 = vector.broadcast %4 : i32 to vector<16x128xi32>
    %6 = arith.addi %5, %2 : vector<16x128xi32>
    %c128_i32 = arith.constant 128 : i32
    %7 = vector.broadcast %c128_i32 : i32 to vector<16x128xi32>
    %8 = arith.muli %6, %7 : vector<16x128xi32>
    %9 = arith.addi %8, %3 : vector<16x128xi32>
    %c2048_i32 = arith.constant 2048 : i32
    %10 = vector.broadcast %c2048_i32 : i32 to vector<16x128xi32>
    %11 = arith.cmpi slt, %9, %10 : vector<16x128xi32>
    %12 = math.absf %0 : vector<16x128xf32>
    %cst = arith.constant 0.000000e+00 : f32
    %13 = vector.broadcast %cst : f32 to vector<16x128xf32>
    %14 = arith.subf %13, %12 : vector<16x128xf32>
    %15 = math.exp %14 : vector<16x128xf32>
    %cst_3 = arith.constant 0.000000e+00 : f32
    %16 = vector.broadcast %cst_3 : f32 to vector<16x128xf32>
    %17 = arith.maximumf %0, %16 : vector<16x128xf32>
    %18 = arith.mulf %0, %1 : vector<16x128xf32>
    %19 = arith.subf %17, %18 : vector<16x128xf32>
    %20 = math.log1p %15 : vector<16x128xf32>
    %21 = arith.addf %19, %20 : vector<16x128xf32>
    %cst_4 = arith.constant 1.000000e+00 : f32
    %22 = vector.broadcast %cst_4 : f32 to vector<16x128xf32>
    %23 = arith.addf %22, %15 : vector<16x128xf32>
    %cst_5 = arith.constant 1.000000e+00 : f32
    %24 = vector.broadcast %cst_5 : f32 to vector<16x128xf32>
    %25 = arith.divf %24, %23 : vector<16x128xf32>
    %cst_6 = arith.constant 0.000000e+00 : f32
    %26 = vector.broadcast %cst_6 : f32 to vector<16x128xf32>
    %27 = arith.cmpf oge, %0, %26 : vector<16x128xf32>
    %28 = arith.mulf %15, %25 : vector<16x128xf32>
    %29 = arith.select %27, %25, %28 : vector<16x128xi1>, vector<16x128xf32>
    %30 = arith.subf %29, %1 : vector<16x128xf32>
    %cst_7 = arith.constant 1.000000e+00 : f32
    %31 = vector.broadcast %cst_7 : f32 to vector<16x128xf32>
    %32 = arith.subf %30, %31 : vector<16x128xf32>
    %cst_8 = arith.constant 5.010000e-02 : f32
    %33 = vector.broadcast %cst_8 : f32 to vector<16x128xf32>
    %34 = arith.divf %32, %33 : vector<16x128xf32>
    %35 = math.exp %34 : vector<16x128xf32>
    %cst_9 = arith.constant 1.000000e+00 : f32
    %36 = vector.broadcast %cst_9 : f32 to vector<16x128xf32>
    %37 = arith.subf %36, %35 : vector<16x128xf32>
    %38 = arith.mulf %21, %37 : vector<16x128xf32>
    %cst_10 = arith.constant 0.000000e+00 : f32
    %39 = vector.broadcast %cst_10 : f32 to vector<16x128xf32>
    %40 = arith.select %11, %38, %39 : vector<16x128xi1>, vector<16x128xf32>
    %41 = vector.shape_cast %40 : vector<16x128xf32> to vector<2x8x128xf32>
    %cst_11 = arith.constant dense<0.000000e+00> : vector<8x128xf32>
    %42 = vector.multi_reduction <add>, %41, %cst_11 [0] : vector<2x8x128xf32> to vector<8x128xf32>
    %c0_12 = arith.constant 0 : index
    %c0_13 = arith.constant 0 : index
    %c0_14 = arith.constant 0 : index
    %43 = vector.load %arg3[%c0_12, %c0_13, %c0_14] : memref<1x8x128xf32, #tpu.memory_space<vmem>>, vector<1x8x128xf32>
    %44 = vector.shape_cast %43 : vector<1x8x128xf32> to vector<8x128xf32>
    %45 = vector.shape_cast %42 : vector<8x128xf32> to vector<1x8x128xf32>
    tpu.vector_store %arg3[%c0_12, %c0_13, %c0_14], %45 {strides = array<i32>} : memref<1x8x128xf32, #tpu.memory_space<vmem>>, vector<1x8x128xf32>,
    return
  }
  func.func @transform_0(%arg0: i32) -> (i32, i32) {
    %c0_i32 = arith.constant 0 : i32
    %c0_i32_0 = arith.constant 0 : i32
    return %arg0, %c0_i32 : i32, i32
  }
  func.func @transform_1(%arg0: i32) -> (i32, i32) {
    %c0_i32 = arith.constant 0 : i32
    %c0_i32_0 = arith.constant 0 : i32
    return %arg0, %c0_i32 : i32, i32
  }
  func.func @transform_2(%arg0: i32) -> (i32, i32, i32) {
    %c0_i32 = arith.constant 0 : i32
    %c0_i32_0 = arith.constant 0 : i32
    %c0_i32_1 = arith.constant 0 : i32
    return %arg0, %c0_i32, %c0_i32_0 : i32, i32, i32
  }
}

</mosaic_0001>

<llo_original>
// kernel: tpu_custom_call.1
$region0: #{tpu_custom_call.1}
  #allocation0 [shape = 'u32[]', space=smem, size = 0x4, offset = 0x4, fixed_abs, tag = 'smem constant byte address 0x4 - core index']
  #allocation1 [shape = 'u32[144,128]{1,0:T(1,128)}', space=vmem, size = 0x12000, scoped, tag = 'internal scratch']
  %s0 = inlined_call_operand.hbm [shape: f32[16,128], index: 0, kind: input, shape index: {}]
  %s1 = inlined_call_operand.hbm [shape: f32[16,128], index: 1, kind: input, shape index: {}]
  %s2 = inlined_call_operand.hbm [shape: f32[1,8,128], index: 2, kind: output, shape index: {}]
  %s3 = sld [smem:[#allocation0]]
  $region26: #{tpu_custom_call.1} parent=0
    _
  %s5 = ssub.s32 1, %s3
  %s6 = scalar_select 0, %s5, %s3
  $region1: #{tpu_custom_call.1} parent=0
    #allocation2 [shape = 'u8[8192]{0}', space=vmem, size = 0x2000, scoped, tag = 'input window, operand 0, single buffered']
    #allocation3 [shape = 's32[1]{0}', space=sflag, size = 0x4, scoped, tag = 'scoped memory for tpu_custom_call.1']
    #allocation4 [shape = 's32[1]{0}', space=sflag, size = 0x4, scoped, tag = 'scoped memory for tpu_custom_call.1']
    #allocation5 [shape = 'u8[8192]{0}', space=vmem, size = 0x2000, scoped, tag = 'input window, operand 1, single buffered']
    #allocation6 [shape = 's32[1]{0}', space=sflag, size = 0x4, scoped, tag = 'scoped memory for tpu_custom_call.1']
    #allocation7 [shape = 'u8[4096]{0}', space=vmem, size = 0x1000, scoped, tag = 'output window, operand 0, single buffered']
    %7 = vsyncpa [#allocation3], 0
    %8 = vsyncpa [#allocation6], 0
    %9 = vsyncpa [#allocation4], 0
    // Predicated region
    $region2: #{tpu_custom_call.1} parent=1 // pred_check
      _
    $region3: #{tpu_custom_call.1} parent=1 // pred_check_branch
      %11 = sbr.rel (0) target = $region5
    $region4: #{tpu_custom_call.1} parent=1 // pred_region
      %s13 = ssub.s32 256, 256
      %14 = vsyncadd [#allocation3], %s13
      %s15 = sshll.u32 [#allocation2], 4
      %s16 = int_to_ptr.vmem [resolvable:$true] %s15
      %21 = dma.hbm_to_vmem [thread:$0]  %s0, 256, %s16, [#allocation3], 128, 128, 8
    $region5: #{tpu_custom_call.1} parent=1 // pred_fallthru
      _
    // Predicated region
    $region6: #{tpu_custom_call.1} parent=1 // pred_check
      _
    $region7: #{tpu_custom_call.1} parent=1 // pred_check_branch
      %23 = sbr.rel (0) target = $region9
    $region8: #{tpu_custom_call.1} parent=1 // pred_region
      %s25 = ssub.s32 256, 256
      %26 = vsyncadd [#allocation6], %s25
      %s27 = sshll.u32 [#allocation5], 4
      %s28 = int_to_ptr.vmem [resolvable:$true] %s27
      %33 = dma.hbm_to_vmem [thread:$0]  %s1, 256, %s28, [#allocation6], 128, 128, 8
    $region9: #{tpu_custom_call.1} parent=1 // pred_fallthru
      _
    // Predicated region
    $region10: #{tpu_custom_call.1} parent=1 // pred_check
      _
    $region11: #{tpu_custom_call.1} parent=1 // pred_check_branch
      %35 = sbr.rel (0) target = $region13
    $region12: #{tpu_custom_call.1} parent=1 // pred_region
      %36 = dma.done [#allocation3], 256
    $region13: #{tpu_custom_call.1} parent=1 // pred_fallthru
      _
    // Predicated region
    $region14: #{tpu_custom_call.1} parent=1 // pred_check
      _
    $region15: #{tpu_custom_call.1} parent=1 // pred_check_branch
      %38 = sbr.rel (0) target = $region17
    $region16: #{tpu_custom_call.1} parent=1 // pred_region
      %39 = dma.done [#allocation6], 256
    $region17: #{tpu_custom_call.1} parent=1 // pred_fallthru
      _
    %v40 = vld [vmem:[#allocation2] sm:$0xff]
    %v41 = vld [vmem:[#allocation2 + $0x8] sm:$0xff]
    %v42 = vld [vmem:[#allocation5] sm:$0xff]
    %v43 = vld [vmem:[#allocation5 + $0x8] sm:$0xff]
    %v44 = vlaneseq
    %v45 = vshrl.u32 %v44, 7
    %v46 = vadd.s32 %v45, 8
    %v47 = vlaneseq
    %v48 = vand.u32 %v47, 127
    %s49 = smul.u32 0, 16
    %v50 = vstv %s49
    %v51 = vadd.s32 %v50, %v45
    %v52 = vadd.s32 %v50, %v46
    %v53 = vmul.u32 %v51, 128
    %v54 = vmul.u32 %v52, 128
    %v55 = vadd.s32 %v53, %v48
    %v56 = vadd.s32 %v54, %v48
    %vm57 = vcmp.lt.s32.totalorder %v55, 2048
    %vm58 = vcmp.lt.s32.totalorder %v56, 2048
    %v59 = vand.u32 2147483647, %v40
    %v60 = vand.u32 2147483647, %v41
    %v61 = vsub.f32 0.0, %v59
    %v62 = vsub.f32 0.0, %v60
    %v63 = vmul.f32 %v61, 1.442695
    %v64 = vpow.pop %v63
    %v65 = vmul.f32 %v62, 1.442695
    %v66 = vpow.pop %v65
    %v67 = vmax.f32 %v40, 0.0
    %v68 = vmax.f32 %v41, 0.0
    %v69 = vmul.f32 %v40, %v42
    %v70 = vmul.f32 %v41, %v43
    %v71 = vsub.f32 %v67, %v69
    %v72 = vsub.f32 %v68, %v70
    %v73 = vadd.f32 %v64, 1.0
    %v74 = vlog2.pop %v73
    %v75 = vmul.f32 %v74, 0.6931472
    %v76 = vmul.f32 -0.5, %v64
    %v77 = vadd.f32 %v76, 1.0
    %v78 = vmul.f32 %v77, %v64
    %v79 = vand.u32 2147483647, %v64
    %vm80 = vcmp.lt.f32.partialorder %v79, 0.0004427343
    %v81 = vsel %vm80, %v78, %v75
    %v82 = vadd.f32 %v66, 1.0
    %v83 = vlog2.pop %v82
    %v84 = vmul.f32 %v83, 0.6931472
    %v85 = vmul.f32 -0.5, %v66
    %v86 = vadd.f32 %v85, 1.0
    %v87 = vmul.f32 %v86, %v66
    %v88 = vand.u32 2147483647, %v66
    %vm89 = vcmp.lt.f32.partialorder %v88, 0.0004427343
    %v90 = vsel %vm89, %v87, %v84
    %v91 = vadd.f32 %v71, %v81
    %v92 = vadd.f32 %v72, %v90
    %v93 = vadd.f32 %v64, 1.0
    %v94 = vadd.f32 %v66, 1.0
    %v95 = vrcp.pop %v93
    %v96 = vmul.f32 1.0, %v95
    %v97 = vrcp.pop %v94
    %v98 = vmul.f32 1.0, %v97
    %vm99 = vcmp.ge.f32.partialorder %v40, 0.0
    %vm100 = vcmp.ge.f32.partialorder %v41, 0.0
    %v101 = vmul.f32 %v64, %v96
    %v102 = vmul.f32 %v66, %v98
    %v103 = vsel %vm99, %v96, %v101
    %v104 = vsel %vm100, %v98, %v102
    %v105 = vsub.f32 %v103, %v42
    %v106 = vsub.f32 %v104, %v43
    %v107 = vsub.f32 %v105, 1.0
    %v108 = vsub.f32 %v106, 1.0
    %v109 = vrcp.pop 0.0501
    %v110 = vmul.f32 %v107, %v109
    %v111 = vmul.f32 %v108, %v109
    %v112 = vmul.f32 %v110, 1.442695
    %v113 = vpow.pop %v112
    %v114 = vmul.f32 %v111, 1.442695
    %v115 = vpow.pop %v114
    %v116 = vsub.f32 1.0, %v113
    %v117 = vsub.f32 1.0, %v115
    %v118 = vmul.f32 %v91, %v116
    %v119 = vmul.f32 %v92, %v117
    %v120 = vsel %vm57, %v118, 0.0
    %v121 = vsel %vm58, %v119, 0.0
    %v122 = vadd.f32 %v120, %v121
    %123 = vst [vmem:[#allocation7] sm:$0xff] %v122
    // Predicated region
    $region18: #{tpu_custom_call.1} parent=1 // pred_check
      _
    $region19: #{tpu_custom_call.1} parent=1 // pred_check_branch
      %125 = sbr.rel (0) target = $region21
    $region20: #{tpu_custom_call.1} parent=1 // pred_region
      %s127 = ssub.s32 128, 128
      %128 = vsyncadd [#allocation4], %s127
      %s130 = sshll.u32 [#allocation7], 4
      %s131 = int_to_ptr.vmem [resolvable:$true] %s130
      %133 = dma.vmem_to_hbm [thread:$0]  %s131, 128, %s2, [#allocation4]
    $region21: #{tpu_custom_call.1} parent=1 // pred_fallthru
      _
    // Predicated region
    $region22: #{tpu_custom_call.1} parent=1 // pred_check
      _
    $region23: #{tpu_custom_call.1} parent=1 // pred_check_branch
      %135 = sbr.rel (0) target = $region25
    $region24: #{tpu_custom_call.1} parent=1 // pred_region
      %136 = dma.done [#allocation4], 128
    $region25: #{tpu_custom_call.1} parent=1 // pred_fallthru
      _
    %137 = vsyncpa [#allocation3], 1
    %138 = vsyncpa [#allocation6], 1
    %139 = vsyncpa [#allocation4], 1

</llo_original>
